<compile_context>
chip_gen: v5e
topology: v5e:2x2
jax: 0.10.0
libtpu: 0.0.40
codegen_flags: <defaults>
</compile_context>

<pallas_src>
import jax
import jax.numpy as jnp
from jax.experimental import pallas as pl
from jax.experimental.pallas import tpu as pltpu


def _cdiv(a, b):
    return -(-a // b)


def _make_kernel(n_rows, tiles_per_chunk):
    def kernel(prob_ref, tgt_ref, w_ref, out_ref, acc_ref):
        # prob_ref: (tn, C) native dtype   tgt_ref: (tn, 1) i32
        # w_ref:    (1, C)  f32 (resident) out_ref: (1, 128) f32 (per-chunk partial)
        # acc_ref:  (tn, 1) f32 scratch, resident across the inner (tile) grid axis
        c_idx = pl.program_id(0)      # chunk (parallel across TCs on v7x)
        i = pl.program_id(1)          # row tile within chunk (reduction axis)

        @pl.when(i == 0)
        def _init():
            acc_ref[...] = jnp.zeros_like(acc_ref)

        prob = prob_ref[...].astype(jnp.float32)      # in-kernel upcast (free under DMA)
        tgt = tgt_ref[...]                            # (tn, 1) i32
        w_row = w_ref[...].astype(jnp.float32)        # (1, C)

        tn, c = prob.shape
        # Row-validity mask for the ragged last tile (no wrapper-side padding).
        row = jax.lax.broadcasted_iota(jnp.int32, (tn, 1), 0)
        global_row = (c_idx * tiles_per_chunk + i) * tn + row
        tgt_eff = jnp.where(global_row < n_rows, tgt, -1)   # invalid rows match nothing

        col = jax.lax.broadcasted_iota(jnp.int32, (tn, c), 1)
        one_hot = col == tgt_eff                              # (tn, C)
        # weight[target[n]] * prob[n, target[n]] via masked lane (C-axis) reduce,
        # with the weight row folded in (no per-sample wt stream needed).
        picked = jnp.sum(jnp.where(one_hot, prob * w_row, 0.0),
                         axis=1, keepdims=True)               # (tn, 1)
        acc_ref[...] += picked

        @pl.when(i == pl.num_programs(1) - 1)
        def _finalize():
            # Single cross-sublane reduce per chunk; write a lane-dense (1,128) block
            # with the partial sum in lane 0 and zeros elsewhere.
            partial = jnp.sum(acc_ref[...])
            lane = jax.lax.broadcasted_iota(jnp.int32, (1, 128), 1)
            out_ref[...] = jnp.where(lane == 0, partial, jnp.float32(0.0))

    return kernel


def nll_loss(prob: jax.Array, target: jax.Array, weight: jax.Array, *,
             tile_rows=None) -> jax.Array:
    """prob: (N, C) float, target: (N,) int, weight: (C,) float -> scalar f32."""
    n, c = prob.shape
    target = target.astype(jnp.int32).reshape(n, 1)
    weight = weight.astype(jnp.float32).reshape(1, c)

    itemsize = jnp.dtype(prob.dtype).itemsize
    # Sublane multiple required for the streamed dtype (f32: 8, bf16: 16, 8-bit: 32).
    sub = 8 if itemsize >= 4 else (16 if itemsize == 2 else 32)

    if tile_rows is None:
        # Byte-targeted row tile: ~4 MiB per (double-buffered) prob buffer, capped so
        # the lane-padded (tn,1) side buffers stay small, clamped to the row count.
        target_bytes = 4 << 20
        tn = max(sub, (target_bytes // max(1, c * itemsize)) // sub * sub)
        tn = min(tn, 4096)
        tn = min(tn, _cdiv(n, sub) * sub)
    else:
        tn = max(sub, _cdiv(tile_rows, sub) * sub)

    num_tiles = _cdiv(n, tn)
    num_chunks = 2 if num_tiles >= 2 else 1          # 2 TCs on v7x; harmless elsewhere
    tiles_per_chunk = _cdiv(num_tiles, num_chunks)

    # Explicit VMEM budget (lane-padded layouts, double buffers) -> vmem_limit_bytes.
    lane = 128
    c_pad = _cdiv(c, lane) * lane
    need = (2 * tn * c_pad * itemsize        # double-buffered prob tile
            + 2 * tn * lane * 4              # double-buffered lane-padded target
            + 2 * 8 * c_pad * 4              # resident weight row
            + tn * lane * 4                  # (tn,1) accumulator scratch
            + 2 * 8 * lane * 4)              # output block
    vmem_limit = int(min(max(need * 3 // 2 + (2 << 20), 24 << 20), 60 << 20))
    # TODO(synk): for vocab-scale C (prob buffer > ~16 MiB even at tn=sub) add an
    # innermost "arbitrary" C grid axis instead of shrinking tn further.

    last_tile = num_tiles - 1

    def prob_map(ci, ti):
        return (jnp.minimum(ci * tiles_per_chunk + ti, last_tile), 0)

    def tgt_map(ci, ti):
        return (jnp.minimum(ci * tiles_per_chunk + ti, last_tile), 0)

    kernel = _make_kernel(n, tiles_per_chunk)

    out = pl.pallas_call(
        kernel,
        out_shape=jax.ShapeDtypeStruct((1, lane * num_chunks), jnp.float32),
        grid_spec=pltpu.PrefetchScalarGridSpec(
            num_scalar_prefetch=0,
            grid=(num_chunks, tiles_per_chunk),
            in_specs=[
                pl.BlockSpec((tn, c), prob_map),
                pl.BlockSpec((tn, 1), tgt_map),
                pl.BlockSpec((1, c), lambda ci, ti: (0, 0)),   # resident weight row
            ],
            out_specs=pl.BlockSpec((1, lane), lambda ci, ti: (0, ci)),
            scratch_shapes=[pltpu.VMEM((tn, 1), jnp.float32)],
        ),
        compiler_params=pltpu.CompilerParams(
            dimension_semantics=("parallel", "arbitrary"),
            vmem_limit_bytes=vmem_limit,
        ),
    )(prob, target, weight)
    # Each chunk's partial sum sits in lane 0 of its 128-lane block; rest are zeros.
    return -jnp.sum(out)


def nll_loss_ref(prob, target, weight):
    # Pure-JAX reference for verification.
    picked = prob[jnp.arange(prob.shape[0]), target]
    w = weight[target]
    return -jnp.sum(w * picked)


if __name__ == "__main__":
    key = jax.random.PRNGKey(0)
    k1, k2, k3 = jax.random.split(key, 3)

    # Test 1: small (N, C) consistent with the module's forward.
    N, C = 8, 32
    logits = jax.random.normal(k1, (N, C), dtype=jnp.float32)
    prob = jax.nn.log_softmax(logits, axis=-1)
    target = jax.random.randint(k2, (N,), 0, C, dtype=jnp.int32)
    weight = jax.random.uniform(k3, (C,), dtype=jnp.float32)

    loss = nll_loss(prob, target, weight)
    jax.block_until_ready(loss)
    ref = nll_loss_ref(prob, target, weight)
    assert jnp.allclose(loss, ref, rtol=1e-5, atol=1e-5), (loss, ref)

    # Test 2: ragged row count + multi-tile + 2-chunk grid (exercises the in-kernel
    # validity mask, the clamped tile index and the per-chunk partial outputs).
    N2, C2 = 37, 160
    logits2 = jax.random.normal(k1, (N2, C2), dtype=jnp.float32)
    prob2 = jax.nn.log_softmax(logits2, axis=-1)
    target2 = jax.random.randint(k2, (N2,), 0, C2, dtype=jnp.int32)
    weight2 = jax.random.uniform(k3, (C2,), dtype=jnp.float32)

    loss2 = nll_loss(prob2, target2, weight2, tile_rows=16)
    jax.block_until_ready(loss2)
    ref2 = nll_loss_ref(prob2, target2, weight2)
    assert jnp.allclose(loss2, ref2, rtol=1e-5, atol=1e-4), (loss2, ref2)

    print("KERNEL_OK")
</pallas_src>

<mosaic_0001>
module attributes {stable_mosaic.version = 11 : i64} {
  func.func @kernel(%arg0: i32, %arg1: i32, %arg2: memref<8x32xf32, #tpu.memory_space<vmem>>, %arg3: memref<8x1xi32, #tpu.memory_space<vmem>>, %arg4: memref<1x32xf32, #tpu.memory_space<vmem>>, %arg5: memref<1x128xf32, #tpu.memory_space<vmem>>, %arg6: memref<8x1xf32, #tpu.memory_space<vmem>>) attributes {dimension_semantics = [#tpu.dimension_semantics<parallel>, #tpu.dimension_semantics<arbitrary>], iteration_bounds = array<i64: 1, 1>, scalar_prefetch = 0 : i64, scratch_operands = 1 : i64, tpu.core_type = #tpu.core_type<tc>, window_params = [{transform_indices = @transform_0, window_bounds = array<i64: 8, 32>}, {transform_indices = @transform_1, window_bounds = array<i64: 8, 1>}, {pipeline_mode = #tpu.pipeline_mode<synchronous>, transform_indices = @transform_2, window_bounds = array<i64: 1, 32>}, {transform_indices = @transform_3, window_bounds = array<i64: 1, 128>}]} {
    %c0_i32 = arith.constant 0 : i32
    %0 = arith.cmpi eq, %arg1, %c0_i32 : i32
    %1 = arith.extui %0 : i1 to i32
    %c0_i32_0 = arith.constant 0 : i32
    %2 = arith.cmpi ne, %1, %c0_i32_0 : i32
    scf.if %2 {
      %cst_14 = arith.constant 0.000000e+00 : f32
      %31 = vector.broadcast %cst_14 : f32 to vector<8x1xf32>
      %c0_15 = arith.constant 0 : index
      %c0_16 = arith.constant 0 : index
      %32 = vector.load %arg6[%c0_15, %c0_16] : memref<8x1xf32, #tpu.memory_space<vmem>>, vector<8x1xf32>
      tpu.vector_store %arg6[%c0_15, %c0_16], %31 {strides = array<i32>} : memref<8x1xf32, #tpu.memory_space<vmem>>, vector<8x1xf32>,
    } else {
    }
    %c0 = arith.constant 0 : index
    %c0_1 = arith.constant 0 : index
    %3 = vector.load %arg2[%c0, %c0_1] : memref<8x32xf32, #tpu.memory_space<vmem>>, vector<8x32xf32>
    %c0_2 = arith.constant 0 : index
    %c0_3 = arith.constant 0 : index
    %4 = vector.load %arg3[%c0_2, %c0_3] : memref<8x1xi32, #tpu.memory_space<vmem>>, vector<8x1xi32>
    %c0_4 = arith.constant 0 : index
    %c0_5 = arith.constant 0 : index
    %5 = vector.load %arg4[%c0_4, %c0_5] : memref<1x32xf32, #tpu.memory_space<vmem>>, vector<1x32xf32>
    %6 = tpu.iota {dimensions = array<i32: 0>} : vector<8x1xi32>
    %c1_i32 = arith.constant 1 : i32
    %7 = arith.muli %arg0, %c1_i32 : i32
    %8 = arith.addi %7, %arg1 : i32
    %c8_i32 = arith.constant 8 : i32
    %9 = arith.muli %8, %c8_i32 : i32
    %10 = vector.broadcast %9 : i32 to vector<8x1xi32>
    %11 = arith.addi %10, %6 : vector<8x1xi32>
    %c8_i32_6 = arith.constant 8 : i32
    %12 = vector.broadcast %c8_i32_6 : i32 to vector<8x1xi32>
    %13 = arith.cmpi slt, %11, %12 : vector<8x1xi32>
    %c-1_i32 = arith.constant -1 : i32
    %14 = vector.broadcast %c-1_i32 : i32 to vector<8x1xi32>
    %15 = arith.select %13, %4, %14 : vector<8x1xi1>, vector<8x1xi32>
    %16 = tpu.iota {dimensions = array<i32: 1>} : vector<8x32xi32>
    %17 = vector.broadcast %15 : vector<8x1xi32> to vector<8x32xi32>
    %18 = arith.cmpi eq, %16, %17 : vector<8x32xi32>
    %19 = vector.broadcast %5 : vector<1x32xf32> to vector<8x32xf32>
    %20 = arith.mulf %3, %19 : vector<8x32xf32>
    %cst = arith.constant 0.000000e+00 : f32
    %21 = vector.broadcast %cst : f32 to vector<8x32xf32>
    %22 = arith.select %18, %20, %21 : vector<8x32xi1>, vector<8x32xf32>
    %cst_7 = arith.constant dense<0.000000e+00> : vector<8xf32>
    %23 = vector.multi_reduction <add>, %22, %cst_7 [1] : vector<8x32xf32> to vector<8xf32>
    %24 = vector.shape_cast %23 : vector<8xf32> to vector<8x1xf32>
    %c0_8 = arith.constant 0 : index
    %c0_9 = arith.constant 0 : index
    %25 = vector.load %arg6[%c0_8, %c0_9] : memref<8x1xf32, #tpu.memory_space<vmem>>, vector<8x1xf32>
    %26 = arith.addf %25, %24 : vector<8x1xf32>
    %c0_10 = arith.constant 0 : index
    %c0_11 = arith.constant 0 : index
    %27 = vector.load %arg6[%c0_10, %c0_11] : memref<8x1xf32, #tpu.memory_space<vmem>>, vector<8x1xf32>
    tpu.vector_store %arg6[%c0_10, %c0_11], %26 {strides = array<i32>} : memref<8x1xf32, #tpu.memory_space<vmem>>, vector<8x1xf32>,
    %c0_i32_12 = arith.constant 0 : i32
    %28 = arith.cmpi eq, %arg1, %c0_i32_12 : i32
    %29 = arith.extui %28 : i1 to i32
    %c0_i32_13 = arith.constant 0 : i32
    %30 = arith.cmpi ne, %29, %c0_i32_13 : i32
    scf.if %30 {
      %c0_14 = arith.constant 0 : index
      %c0_15 = arith.constant 0 : index
      %31 = vector.load %arg6[%c0_14, %c0_15] : memref<8x1xf32, #tpu.memory_space<vmem>>, vector<8x1xf32>
      %32 = vector.shape_cast %31 : vector<8x1xf32> to vector<1x8x1xf32>
      %cst_16 = arith.constant dense<0.000000e+00> : vector<1xf32>
      %33 = vector.multi_reduction <add>, %32, %cst_16 [1, 2] : vector<1x8x1xf32> to vector<1xf32>
      %34 = vector.shape_cast %33 : vector<1xf32> to vector<1x1x1xf32>
      %35 = vector.extract %34[0, 0, 0] : f32 from vector<1x1x1xf32>
      %36 = tpu.iota {dimensions = array<i32: 1>} : vector<1x128xi32>
      %c0_i32_17 = arith.constant 0 : i32
      %37 = vector.broadcast %c0_i32_17 : i32 to vector<1x128xi32>
      %38 = arith.cmpi eq, %36, %37 : vector<1x128xi32>
      %cst_18 = arith.constant 0.000000e+00 : f32
      %39 = vector.broadcast %35 : f32 to vector<1x128xf32>
      %40 = vector.broadcast %cst_18 : f32 to vector<1x128xf32>
      %41 = arith.select %38, %39, %40 : vector<1x128xi1>, vector<1x128xf32>
      %c0_19 = arith.constant 0 : index
      %c0_20 = arith.constant 0 : index
      %42 = vector.load %arg5[%c0_19, %c0_20] : memref<1x128xf32, #tpu.memory_space<vmem>>, vector<1x128xf32>
      tpu.vector_store %arg5[%c0_19, %c0_20], %41 {strides = array<i32>} : memref<1x128xf32, #tpu.memory_space<vmem>>, vector<1x128xf32>,
    } else {
    }
    return
  }
  func.func @transform_0(%arg0: i32, %arg1: i32) -> (i32, i32) {
    %c1_i32 = arith.constant 1 : i32
    %0 = arith.muli %arg0, %c1_i32 : i32
    %1 = arith.addi %0, %arg1 : i32
    %c0_i32 = arith.constant 0 : i32
    %2 = arith.minsi %1, %c0_i32 : i32
    %c0_i32_0 = arith.constant 0 : i32
    %c0_i32_1 = arith.constant 0 : i32
    return %2, %c0_i32_0 : i32, i32
  }
  func.func @transform_1(%arg0: i32, %arg1: i32) -> (i32, i32) {
    %c1_i32 = arith.constant 1 : i32
    %0 = arith.muli %arg0, %c1_i32 : i32
    %1 = arith.addi %0, %arg1 : i32
    %c0_i32 = arith.constant 0 : i32
    %2 = arith.minsi %1, %c0_i32 : i32
    %c0_i32_0 = arith.constant 0 : i32
    %c0_i32_1 = arith.constant 0 : i32
    return %2, %c0_i32_0 : i32, i32
  }
  func.func @transform_2(%arg0: i32, %arg1: i32) -> (i32, i32) {
    %c0_i32 = arith.constant 0 : i32
    %c0_i32_0 = arith.constant 0 : i32
    %c0_i32_1 = arith.constant 0 : i32
    return %c0_i32, %c0_i32_0 : i32, i32
  }
  func.func @transform_3(%arg0: i32, %arg1: i32) -> (i32, i32) {
    %c0_i32 = arith.constant 0 : i32
    %c0_i32_0 = arith.constant 0 : i32
    return %c0_i32, %arg0 : i32, i32
  }
}

</mosaic_0001>

<llo_original>
// kernel: tpu_custom_call.1
$region0: #{tpu_custom_call.1}
  #allocation0 [shape = 'u32[]', space=smem, size = 0x4, offset = 0x4, fixed_abs, tag = 'smem constant byte address 0x4 - core index']
  #allocation1 [shape = 'u32[72,128]{1,0:T(1,128)}', space=vmem, size = 0x9000, scoped, tag = 'internal scratch']
  #allocation2 [shape = 'f32[8,1]{1,0:T(8,128)}', space=vmem, size = 0x1000, scoped, tag = 'scratch operand']
  %s0 = inlined_call_operand.vmem [shape: f32[8,32], index: 0, kind: input, shape index: {}]
  %s1 = inlined_call_operand.vmem [shape: s32[8,1], index: 1, kind: input, shape index: {}]
  %s2 = inlined_call_operand.vmem [shape: f32[1,32], index: 2, kind: input, shape index: {}]
  %s3 = inlined_call_operand.hbm [shape: f32[1,128], index: 3, kind: output, shape index: {}]
  %s4 = sld [smem:[#allocation0]]
  $region30: #{tpu_custom_call.1} parent=0
    _
  %s6 = ssub.s32 1, %s4
  %s7 = scalar_select 0, %s6, %s4
  $region1: #{tpu_custom_call.1} parent=0
    #allocation3 [shape = 'u8[512]{0}', space=vmem, size = 0x400, scoped, tag = 'output window, operand 0, single buffered']
    #allocation4 [shape = 's32[1]{0}', space=sflag, size = 0x4, scoped, tag = 'scoped memory for tpu_custom_call.1']
    %8 = vsyncpa [#allocation4], 0
    // Predicated region
    $region2: #{tpu_custom_call.1} parent=1 // pred_check
      _
    $region3: #{tpu_custom_call.1} parent=1 // pred_check_branch
      %10 = sbr.rel (0) target = $region5
    $region4: #{tpu_custom_call.1} parent=1 // pred_region
      %s11 = sadd.s32 0, 0
      %p12 = scmp.lt.s32.totalorder %s11, 0
      %s13 = scalar_select %p12, %s11, 0
      %p14 = scmp.lt.s32.totalorder %s13, 0
      %s15 = scalar_select %p14, %s13, 0
      %s16 = smul.addr %s15, 8
      %s17 = scalar_lea.vmem %s0, %s16
      %s18 = sadd.s32 0, 0
      %p19 = scmp.lt.s32.totalorder %s18, 0
      %s20 = scalar_select %p19, %s18, 0
    $region5: #{tpu_custom_call.1} parent=1 // pred_fallthru
      _
    // Predicated region
    $region6: #{tpu_custom_call.1} parent=1 // pred_check
      _
    $region7: #{tpu_custom_call.1} parent=1 // pred_check_branch
      %22 = sbr.rel (0) target = $region9
    $region8: #{tpu_custom_call.1} parent=1 // pred_region
      %s23 = sadd.s32 0, 0
      %p24 = scmp.lt.s32.totalorder %s23, 0
      %s25 = scalar_select %p24, %s23, 0
      %p26 = scmp.lt.s32.totalorder %s25, 0
      %s27 = scalar_select %p26, %s25, 0
      %s28 = smul.addr %s27, 8
      %s29 = scalar_lea.vmem %s1, %s28
      %s30 = sadd.s32 0, 0
      %p31 = scmp.lt.s32.totalorder %s30, 0
      %s32 = scalar_select %p31, %s30, 0
    $region9: #{tpu_custom_call.1} parent=1 // pred_fallthru
      _
    // Predicated region
    $region10: #{tpu_custom_call.1} parent=1 // pred_check
      _
    $region11: #{tpu_custom_call.1} parent=1 // pred_check_branch
      %34 = sbr.rel (0) target = $region13
    $region12: #{tpu_custom_call.1} parent=1 // pred_region
      _
    $region13: #{tpu_custom_call.1} parent=1 // pred_fallthru
      _
    %s35 = sadd.s32 0, 0
    %p36 = scmp.lt.s32.totalorder %s35, 0
    %s37 = scalar_select %p36, %s35, 0
    %p38 = scmp.lt.s32.totalorder %s37, 0
    %s39 = scalar_select %p38, %s37, 0
    %s40 = smul.addr %s39, 8
    %s41 = scalar_lea.vmem %s0, %s40
    %s42 = sadd.s32 0, 0
    %p43 = scmp.lt.s32.totalorder %s42, 0
    %s44 = scalar_select %p43, %s42, 0
    %p45 = scmp.lt.s32.totalorder %s44, 0
    %s46 = scalar_select %p45, %s44, 0
    %s47 = smul.addr %s46, 8
    %s48 = scalar_lea.vmem %s1, %s47
    %s49 = sadd.s32 0, 0
    %p50 = scmp.lt.s32.totalorder %s49, 0
    %s51 = scalar_select %p50, %s49, 0
    %p52 = scmp.lt.s32.totalorder %s51, 0
    %s53 = scalar_select %p52, %s51, 0
    %s54 = smul.addr %s53, 8
    %s55 = scalar_lea.vmem %s0, %s54
    %s56 = sadd.s32 0, 0
    %p57 = scmp.lt.s32.totalorder %s56, 0
    %s58 = scalar_select %p57, %s56, 0
    %s59 = sadd.s32 0, 0
    %p60 = scmp.lt.s32.totalorder %s59, 0
    %s61 = scalar_select %p60, %s59, 0
    %p62 = scmp.lt.s32.totalorder %s61, 0
    %s63 = scalar_select %p62, %s61, 0
    %s64 = smul.addr %s63, 8
    %s65 = scalar_lea.vmem %s1, %s64
    %s66 = sadd.s32 0, 0
    %p67 = scmp.lt.s32.totalorder %s66, 0
    %s68 = scalar_select %p67, %s66, 0
    %p69 = scmp.eq.s32.totalorder 0, 0
    // Predicated region
    $region14: #{tpu_custom_call.1} parent=1 // pred_check
      %p70 = pneg %p69
    $region15: #{tpu_custom_call.1} parent=1 // pred_check_branch
      %72 = sbr.rel (%p70) target = $region17
    $region16: #{tpu_custom_call.1} parent=1 // pred_region
      %vm73 = vcmask 7168
      %74 = vst.msk [vmem:[#allocation2] sm:$0xff] %vm73, 0.0
    $region17: #{tpu_custom_call.1} parent=1 // pred_fallthru
      _
    %v75 = vld [vmem:[%s55] sm:$0xff]
    %v76 = vld [vmem:[%s65] sm:$0xff]
    %v77 = vld [vmem:[%s2] sm:$0x1]
    %v78 = vlaneseq
    %v79 = vshrl.u32 %v78, 7
    %s80 = sadd.s32 0, 0
    %s81 = smul.u32 %s80, 8
    %v82 = vstv %s81
    %v83 = vadd.s32 %v82, %v79
    %vm84 = vcmp.lt.s32.totalorder %v83, 8
    %v85 = vsel %vm84, %v76, 4294967295
    %v86 = vlaneseq
    %v87 = vand.u32 %v86, 127
    %88 = vset.pattern.permute.xlu0 0
    %89 = vperm.xlu0 %88, %v85
    %v90 = vpop.permute.xlu0 %89
    %vm91 = vcmp.eq.s32.totalorder %v87, %v90
    %v93 = vperm.slane %v77, 0
    %v95 = vmul.f32 %v75, %v93
    %v96 = vsel %vm91, %v95, 0.0
    %vm97 = vcmask 261120
    %v98 = vsel %vm97, %v96, 0.0
    %99 = vadd.xlane.f32.xlu0 %v98
    %v100 = vpop.xlane.xlu0 %99
    %v101 = vld [vmem:[#allocation2] sm:$0xff]
    %v102 = vadd.f32 %v101, %v100
    %vm103 = vcmask 7168
    %104 = vst.msk [vmem:[#allocation2] sm:$0xff] %vm103, %v102
    // Predicated region
    $region18: #{tpu_custom_call.1} parent=1 // pred_check
      %p105 = pneg %p69
    $region19: #{tpu_custom_call.1} parent=1 // pred_check_branch
      %107 = sbr.rel (%p105) target = $region21
    $region20: #{tpu_custom_call.1} parent=1 // pred_region
      %v108 = vld [vmem:[#allocation2] sm:$0xff]
      %v109 = vsel %vm103, %v108, 0.0
      %110 = vadd.xlane.f32.xlu0 %v109
      %v111 = vpop.xlane.xlu0 %110
      %v112 = vrot.slane %v111, 4
      %v113 = vadd.f32 %v111, %v112
      %v114 = vrot.slane %v113, 2
      %v115 = vadd.f32 %v113, %v114
      %v116 = vrot.slane %v115, 1
      %v117 = vadd.f32 %v115, %v116
      %s118 = vtos %v117
      %vm119 = vcmp.eq.s32.totalorder %v87, 0
      %v120 = vstv %s118
      %v121 = vsel %vm119, %v120, 0.0
      %122 = vst [vmem:[#allocation3] sm:$0x1] %v121
    $region21: #{tpu_custom_call.1} parent=1 // pred_fallthru
      _
    // Predicated region
    $region22: #{tpu_custom_call.1} parent=1 // pred_check
      _
    $region23: #{tpu_custom_call.1} parent=1 // pred_check_branch
      %124 = sbr.rel (0) target = $region25
    $region24: #{tpu_custom_call.1} parent=1 // pred_region
      %126 = vsyncadd [#allocation4], 0
      %s128 = sshll.u32 [#allocation3], 4
      %s129 = int_to_ptr.vmem [resolvable:$true] %s128
      %s130 = sshll.u32 %s3, 4
      %s131 = int_to_ptr.hbm [resolvable:$true] %s130
      %133 = dma.vmem_to_hbm [thread:$0]  %s129, 16, %s131, [#allocation4]
    $region25: #{tpu_custom_call.1} parent=1 // pred_fallthru
      _
    // Predicated region
    $region26: #{tpu_custom_call.1} parent=1 // pred_check
      _
    $region27: #{tpu_custom_call.1} parent=1 // pred_check_branch
      %135 = sbr.rel (0) target = $region29
    $region28: #{tpu_custom_call.1} parent=1 // pred_region
      %137 = dma.done [#allocation4], 16
    $region29: #{tpu_custom_call.1} parent=1 // pred_fallthru
      _
    %138 = vsyncpa [#allocation4], 1

</llo_original>
